<compile_context>
chip_gen: v5e
topology: v5e:2x2
jax: 0.10.0
libtpu: 0.0.40
codegen_flags: <defaults>
</compile_context>

<pallas_src>
import functools

import jax
import jax.numpy as jnp
from jax import lax
from jax.experimental import pallas as pl
from jax.experimental.pallas import tpu as pltpu


_TILE = 512              # multiple of (8, 128); 1 MiB f32 K-tile -> v7x-safe
_SINGLE_TILE_MAX = 512   # below this, one tile covers the whole (n, n) matrix


def _round_up(x, m):
    return ((x + m - 1) // m) * m


def _mmd_tile_kernel(scale_ref, zr_ref, zc_ref, sqr_ref, sqc_ref,
                     wr_ref, wc_ref, out_ref, acc_ref, *, n_kernels):
    i = pl.program_id(0)
    j = pl.program_id(1)

    @pl.when(j == 0)
    def _init():
        acc_ref[...] = jnp.zeros_like(acc_ref)

    # K over Z x Z is symmetric (and so is w_i * w_j): only the upper triangle
    # of tiles is computed; off-diagonal tiles count twice.
    # TODO(synk): with the triangular skip, a contiguous megacore split of the
    # row axis is load-imbalanced (~3:1); an interleaved row-tile assignment
    # would recover the full 2x on v7x.
    @pl.when(j >= i)
    def _compute():
        # Gram tile on the MXU: contract the feature dim of BOTH operands,
        # native input dtype (no upcast), f32 accumulation.
        g = lax.dot_general(zr_ref[...], zc_ref[...],
                            (((1,), (1,)), ((), ())),
                            preferred_element_type=jnp.float32)
        # Pairwise squared distances from the hoisted row norms (clamp the
        # Gram-trick cancellation noise at 0).
        l2 = jnp.maximum(sqr_ref[...] + sqc_ref[...] - 2.0 * g, 0.0)
        # The 5 RBF bandwidths differ by exactly 2x, so
        #   sum_k exp(-l2 / (bw * 2^(k-2))) = base + base^2 + base^4 + ...
        # with base = exp(-l2 / (max_mult * bw)): ONE exp (EUP) + VPU muls.
        # TODO(synk): optional bf16 element math here (v6e/v7x) after
        # validating against the 1e-4 tolerance.
        base = jnp.exp(l2 * scale_ref[0, 0])
        k_sum = base
        term = base
        for _ in range(n_kernels - 1):
            term = term * term
            k_sum = k_sum + term
        # Tile contribution = w_row^T K_tile w_col  (w already carries the
        # +1/Nx, -1/Ny block-mean weights; padded rows have w == 0).
        row = jnp.sum(k_sum * wc_ref[...], axis=1, keepdims=True)   # (tm, 1)
        tile_val = jnp.sum(row * wr_ref[...])
        mult = jnp.where(j == i, jnp.float32(1.0), jnp.float32(2.0))
        # Scalar accumulator lives in a (1,1) VMEM scratch tile: identical cost
        # to SMEM here (never touches HBM) and the store path from a vector
        # reduction is uniformly supported.
        acc_ref[...] += mult * tile_val

    @pl.when(j == pl.num_programs(1) - 1)
    def _finalize():
        # Lane-dense (8,128) partial per row tile; the wrapper reduces them.
        out_ref[...] = jnp.broadcast_to(acc_ref[...], (1, 8, 128))


def mmd_loss(X, Y, n_kernels=5, mul_factor=2.0):
    """MMD loss with the multi-bandwidth RBF kernel (bandwidth=None path)."""
    assert X.ndim == 2 and Y.ndim == 2 and X.shape[1] == Y.shape[1]
    # The 1-exp + repeated-squaring trick requires consecutive bandwidth
    # multipliers to differ by exactly 2x (the module's default mul_factor).
    assert mul_factor == 2.0 and n_kernels >= 1

    n_x, d = X.shape
    n_y = Y.shape[0]
    n = n_x + n_y
    max_multiplier = float(mul_factor ** ((n_kernels - 1) - n_kernels // 2))

    # ---- O(n*D) wrapper-side precompute: row norms, weights, bandwidth ----
    x32 = X.astype(jnp.float32)
    y32 = Y.astype(jnp.float32)
    sq_x = jnp.sum(x32 * x32, axis=1)                    # (n_x,)
    sq_y = jnp.sum(y32 * y32, axis=1)                    # (n_y,)

    # Closed-form bandwidth (equals the reference's unclamped L2 sum):
    #   sum_{i,j} ||z_i - z_j||^2 = 2*n*sum_i||z_i||^2 - 2*||sum_i z_i||^2
    sum_sq = jnp.sum(sq_x) + jnp.sum(sq_y)
    col_sum = jnp.sum(x32, axis=0) + jnp.sum(y32, axis=0)
    l2_total = 2.0 * n * sum_sq - 2.0 * jnp.dot(col_sum, col_sum)
    bandwidth = l2_total / float(n * n - n)
    # Guard the degenerate all-rows-identical case (reference would NaN).
    bandwidth = jnp.maximum(bandwidth, jnp.float32(jnp.finfo(jnp.float32).tiny))
    # One exact scalar divide; every per-element op in the kernel is a multiply.
    neg_scale = (jnp.float32(-1.0 / max_multiplier) / bandwidth).reshape(1, 1)
    neg_scale = neg_scale.astype(jnp.float32)

    # ---- tiling over the (n, n) kernel matrix ----
    if n <= _SINGLE_TILE_MAX:
        tile = _round_up(n, 8)          # one tile == the full matrix
    else:
        tile = _TILE
    n_pad = _round_up(n, tile)
    n_t = n_pad // tile
    pad = n_pad - n

    # Z padded with zero rows; padded rows get weight 0 so they contribute 0.
    z = jnp.concatenate([X, Y], axis=0)
    sq = jnp.concatenate([sq_x, sq_y], axis=0)
    w = jnp.concatenate([jnp.full((n_x,), 1.0 / n_x, jnp.float32),
                         jnp.full((n_y,), -1.0 / n_y, jnp.float32)], axis=0)
    if pad:
        z = jnp.concatenate([z, jnp.zeros((pad, d), z.dtype)], axis=0)
        sq = jnp.concatenate([sq, jnp.zeros((pad,), jnp.float32)], axis=0)
        w = jnp.concatenate([w, jnp.zeros((pad,), jnp.float32)], axis=0)

    sq_rows = sq.reshape(n_pad, 1)
    sq_cols = sq.reshape(1, n_pad)
    w_rows = w.reshape(n_pad, 1)
    w_cols = w.reshape(1, n_pad)

    # ---- VMEM budget: double-buffered row/col blocks + K-tile temporaries ----
    # TODO(synk): for very large feature dims (d >~ 4k f32) also tile d so the
    # row/col blocks stay within this budget.
    in_itemsize = jnp.dtype(z.dtype).itemsize
    block_bytes = (2 * tile * d * in_itemsize        # Z row-block + col-block
                   + 4 * tile * 4)                   # sq / w row + col blocks
    vmem_bytes = 2 * block_bytes + 10 * tile * tile * 4 + (2 << 20)
    vmem_bytes = int(min(max(vmem_bytes, 32 << 20), 48 << 20))  # v7x has 64 MiB

    kernel = functools.partial(_mmd_tile_kernel, n_kernels=n_kernels)

    partials = pl.pallas_call(
        kernel,
        out_shape=jax.ShapeDtypeStruct((n_t, 8, 128), jnp.float32),
        grid=(n_t, n_t),
        in_specs=[
            pl.BlockSpec(memory_space=pltpu.MemorySpace.SMEM),   # neg_scale
            pl.BlockSpec((tile, d), lambda i, j: (i, 0)),        # Z row block
            pl.BlockSpec((tile, d), lambda i, j: (j, 0)),        # Z col block
            pl.BlockSpec((tile, 1), lambda i, j: (i, 0)),        # row norms (rows)
            pl.BlockSpec((1, tile), lambda i, j: (0, j)),        # row norms (cols)
            pl.BlockSpec((tile, 1), lambda i, j: (i, 0)),        # weights (rows)
            pl.BlockSpec((1, tile), lambda i, j: (0, j)),        # weights (cols)
        ],
        out_specs=pl.BlockSpec((1, 8, 128), lambda i, j: (i, 0, 0)),
        scratch_shapes=[pltpu.VMEM((1, 1), jnp.float32)],
        compiler_params=pltpu.CompilerParams(
            dimension_semantics=("parallel", "arbitrary"),
            vmem_limit_bytes=vmem_bytes),
    )(neg_scale, z, z, sq_rows, sq_cols, w_rows, w_cols)

    # Per-row-tile partial sums (each broadcast over its (8,128) block).
    # TODO(synk): for many tiny MMD instances, batch them over an extra grid
    # axis in one pallas_call instead of paying per-call launch overhead.
    return jnp.sum(partials[:, 0, 0])


def _mmd_loss_ref(X, Y, n_kernels=5, mul_factor=2.0):
    """Pure-JAX reference mirroring the PyTorch module."""
    Z = jnp.concatenate([X, Y], axis=0).astype(jnp.float32)
    diff = Z[:, None, :] - Z[None, :, :]
    l2 = jnp.sum(diff * diff, axis=-1)
    n = Z.shape[0]
    bw = jnp.sum(l2) / (n * n - n)
    mults = mul_factor ** (jnp.arange(n_kernels) - n_kernels // 2)
    K = jnp.sum(jnp.exp(-l2[None, ...] / (bw * mults)[:, None, None]), axis=0)
    nx = X.shape[0]
    xx = jnp.mean(K[:nx, :nx])
    xy = jnp.mean(K[:nx, nx:])
    yy = jnp.mean(K[nx:, nx:])
    return xx - 2 * xy + yy


if __name__ == "__main__":
    key = jax.random.PRNGKey(0)
    kx, ky = jax.random.split(key)
    # Small shapes: batch=8 per distribution, hidden=32.
    X = jax.random.normal(kx, (8, 32), dtype=jnp.float32)
    Y = jax.random.normal(ky, (8, 32), dtype=jnp.float32) + 0.5

    out = mmd_loss(X, Y)
    out = jax.block_until_ready(out)

    ref = _mmd_loss_ref(X, Y)
    assert jnp.allclose(out, ref, atol=1e-4, rtol=1e-4), (out, ref)

    print("KERNEL_OK")
</pallas_src>

<mosaic_0001>
module attributes {stable_mosaic.version = 11 : i64} {
  func.func @_mmd_tile_kernel(%arg0: i32, %arg1: i32, %arg2: memref<1x1xf32, #tpu.memory_space<smem>>, %arg3: memref<16x32xf32, #tpu.memory_space<vmem>>, %arg4: memref<16x32xf32, #tpu.memory_space<vmem>>, %arg5: memref<16x1xf32, #tpu.memory_space<vmem>>, %arg6: memref<1x16xf32, #tpu.memory_space<vmem>>, %arg7: memref<16x1xf32, #tpu.memory_space<vmem>>, %arg8: memref<1x16xf32, #tpu.memory_space<vmem>>, %arg9: memref<1x8x128xf32, #tpu.memory_space<vmem>>, %arg10: memref<1x1xf32, #tpu.memory_space<vmem>>) attributes {dimension_semantics = [#tpu.dimension_semantics<parallel>, #tpu.dimension_semantics<arbitrary>], iteration_bounds = array<i64: 1, 1>, scalar_prefetch = 0 : i64, scratch_operands = 1 : i64, tpu.core_type = #tpu.core_type<tc>, window_params = [{transform_indices = @transform_0, window_bounds = array<i64: 1, 1>}, {transform_indices = @transform_1, window_bounds = array<i64: 16, 32>}, {transform_indices = @transform_2, window_bounds = array<i64: 16, 32>}, {transform_indices = @transform_3, window_bounds = array<i64: 16, 1>}, {transform_indices = @transform_4, window_bounds = array<i64: 1, 16>}, {transform_indices = @transform_5, window_bounds = array<i64: 16, 1>}, {transform_indices = @transform_6, window_bounds = array<i64: 1, 16>}, {transform_indices = @transform_7, window_bounds = array<i64: 1, 8, 128>}]} {
    %c0_i32 = arith.constant 0 : i32
    %0 = arith.cmpi eq, %arg1, %c0_i32 : i32
    %1 = arith.extui %0 : i1 to i32
    %c0_i32_0 = arith.constant 0 : i32
    %2 = arith.cmpi ne, %1, %c0_i32_0 : i32
    scf.if %2 {
      %cst = arith.constant 0.000000e+00 : f32
      %9 = vector.broadcast %cst : f32 to vector<1x1xf32>
      %c0 = arith.constant 0 : index
      %c0_4 = arith.constant 0 : index
      %10 = vector.load %arg10[%c0, %c0_4] : memref<1x1xf32, #tpu.memory_space<vmem>>, vector<1x1xf32>
      tpu.vector_store %arg10[%c0, %c0_4], %9 {strides = array<i32>} : memref<1x1xf32, #tpu.memory_space<vmem>>, vector<1x1xf32>,
    } else {
    }
    %3 = arith.cmpi sge, %arg1, %arg0 : i32
    %4 = arith.extui %3 : i1 to i32
    %c0_i32_1 = arith.constant 0 : i32
    %5 = arith.cmpi ne, %4, %c0_i32_1 : i32
    scf.if %5 {
      %c0 = arith.constant 0 : index
      %c0_4 = arith.constant 0 : index
      %9 = vector.load %arg3[%c0, %c0_4] : memref<16x32xf32, #tpu.memory_space<vmem>>, vector<16x32xf32>
      %c0_5 = arith.constant 0 : index
      %c0_6 = arith.constant 0 : index
      %10 = vector.load %arg4[%c0_5, %c0_6] : memref<16x32xf32, #tpu.memory_space<vmem>>, vector<16x32xf32>
      %cst = arith.constant dense<0.000000e+00> : vector<16x16xf32>
      %11 = tpu.matmul %9, %10, %cst {dimension_numbers = #tpu.dot_dimension_numbers<[1], [1], [0], [0], [0, 0, 1, 0], [], []>} : vector<16x32xf32>, vector<16x32xf32>, vector<16x16xf32> -> vector<16x16xf32>
      %c0_7 = arith.constant 0 : index
      %c0_8 = arith.constant 0 : index
      %12 = vector.load %arg5[%c0_7, %c0_8] : memref<16x1xf32, #tpu.memory_space<vmem>>, vector<16x1xf32>
      %c0_9 = arith.constant 0 : index
      %c0_10 = arith.constant 0 : index
      %13 = vector.load %arg6[%c0_9, %c0_10] : memref<1x16xf32, #tpu.memory_space<vmem>>, vector<1x16xf32>
      %14 = vector.broadcast %12 : vector<16x1xf32> to vector<16x16xf32>
      %15 = vector.broadcast %13 : vector<1x16xf32> to vector<16x16xf32>
      %16 = arith.addf %14, %15 : vector<16x16xf32>
      %cst_11 = arith.constant 2.000000e+00 : f32
      %17 = vector.broadcast %cst_11 : f32 to vector<16x16xf32>
      %18 = arith.mulf %17, %11 : vector<16x16xf32>
      %19 = arith.subf %16, %18 : vector<16x16xf32>
      %cst_12 = arith.constant 0.000000e+00 : f32
      %20 = vector.broadcast %cst_12 : f32 to vector<16x16xf32>
      %21 = arith.maximumf %19, %20 : vector<16x16xf32>
      %c0_13 = arith.constant 0 : index
      %c0_14 = arith.constant 0 : index
      %22 = memref.load %arg2[%c0_13, %c0_14] : memref<1x1xf32, #tpu.memory_space<smem>>
      %23 = vector.broadcast %22 : f32 to vector<16x16xf32>
      %24 = arith.mulf %21, %23 : vector<16x16xf32>
      %25 = math.exp %24 : vector<16x16xf32>
      %26 = arith.mulf %25, %25 : vector<16x16xf32>
      %27 = arith.addf %25, %26 : vector<16x16xf32>
      %28 = arith.mulf %26, %26 : vector<16x16xf32>
      %29 = arith.addf %27, %28 : vector<16x16xf32>
      %30 = arith.mulf %28, %28 : vector<16x16xf32>
      %31 = arith.addf %29, %30 : vector<16x16xf32>
      %32 = arith.mulf %30, %30 : vector<16x16xf32>
      %33 = arith.addf %31, %32 : vector<16x16xf32>
      %c0_15 = arith.constant 0 : index
      %c0_16 = arith.constant 0 : index
      %34 = vector.load %arg8[%c0_15, %c0_16] : memref<1x16xf32, #tpu.memory_space<vmem>>, vector<1x16xf32>
      %35 = vector.broadcast %34 : vector<1x16xf32> to vector<16x16xf32>
      %36 = arith.mulf %33, %35 : vector<16x16xf32>
      %cst_17 = arith.constant dense<0.000000e+00> : vector<16xf32>
      %37 = vector.multi_reduction <add>, %36, %cst_17 [1] : vector<16x16xf32> to vector<16xf32>
      %38 = vector.shape_cast %37 : vector<16xf32> to vector<16x1xf32>
      %c0_18 = arith.constant 0 : index
      %c0_19 = arith.constant 0 : index
      %39 = vector.load %arg7[%c0_18, %c0_19] : memref<16x1xf32, #tpu.memory_space<vmem>>, vector<16x1xf32>
      %40 = arith.mulf %38, %39 : vector<16x1xf32>
      %41 = vector.shape_cast %40 : vector<16x1xf32> to vector<1x16x1xf32>
      %cst_20 = arith.constant dense<0.000000e+00> : vector<1xf32>
      %42 = vector.multi_reduction <add>, %41, %cst_20 [1, 2] : vector<1x16x1xf32> to vector<1xf32>
      %43 = vector.shape_cast %42 : vector<1xf32> to vector<1x1x1xf32>
      %44 = vector.extract %43[0, 0, 0] : f32 from vector<1x1x1xf32>
      %45 = arith.cmpi eq, %arg1, %arg0 : i32
      %cst_21 = arith.constant 1.000000e+00 : f32
      %cst_22 = arith.constant 2.000000e+00 : f32
      %46 = arith.select %45, %cst_21, %cst_22 : f32
      %c0_23 = arith.constant 0 : index
      %c0_24 = arith.constant 0 : index
      %47 = vector.load %arg10[%c0_23, %c0_24] : memref<1x1xf32, #tpu.memory_space<vmem>>, vector<1x1xf32>
      %48 = arith.mulf %46, %44 : f32
      %49 = vector.broadcast %48 : f32 to vector<1x1xf32>
      %50 = arith.addf %47, %49 : vector<1x1xf32>
      %c0_25 = arith.constant 0 : index
      %c0_26 = arith.constant 0 : index
      %51 = vector.load %arg10[%c0_25, %c0_26] : memref<1x1xf32, #tpu.memory_space<vmem>>, vector<1x1xf32>
      tpu.vector_store %arg10[%c0_25, %c0_26], %50 {strides = array<i32>} : memref<1x1xf32, #tpu.memory_space<vmem>>, vector<1x1xf32>,
    } else {
    }
    %c0_i32_2 = arith.constant 0 : i32
    %6 = arith.cmpi eq, %arg1, %c0_i32_2 : i32
    %7 = arith.extui %6 : i1 to i32
    %c0_i32_3 = arith.constant 0 : i32
    %8 = arith.cmpi ne, %7, %c0_i32_3 : i32
    scf.if %8 {
      %c0 = arith.constant 0 : index
      %c0_4 = arith.constant 0 : index
      %9 = vector.load %arg10[%c0, %c0_4] : memref<1x1xf32, #tpu.memory_space<vmem>>, vector<1x1xf32>
      %10 = vector.shape_cast %9 : vector<1x1xf32> to vector<1x1x1xf32>
      %11 = vector.broadcast %10 : vector<1x1x1xf32> to vector<1x8x128xf32>
      %c0_5 = arith.constant 0 : index
      %c0_6 = arith.constant 0 : index
      %c0_7 = arith.constant 0 : index
      %12 = vector.load %arg9[%c0_5, %c0_6, %c0_7] : memref<1x8x128xf32, #tpu.memory_space<vmem>>, vector<1x8x128xf32>
      tpu.vector_store %arg9[%c0_5, %c0_6, %c0_7], %11 {strides = array<i32>} : memref<1x8x128xf32, #tpu.memory_space<vmem>>, vector<1x8x128xf32>,
    } else {
    }
    return
  }
  func.func @transform_0(%arg0: i32, %arg1: i32) -> (i32, i32) {
    %c0_i32 = arith.constant 0 : i32
    %c0_i32_0 = arith.constant 0 : i32
    %c0_i32_1 = arith.constant 0 : i32
    return %c0_i32, %c0_i32_0 : i32, i32
  }
  func.func @transform_1(%arg0: i32, %arg1: i32) -> (i32, i32) {
    %c0_i32 = arith.constant 0 : i32
    %c0_i32_0 = arith.constant 0 : i32
    return %arg0, %c0_i32 : i32, i32
  }
  func.func @transform_2(%arg0: i32, %arg1: i32) -> (i32, i32) {
    %c0_i32 = arith.constant 0 : i32
    %c0_i32_0 = arith.constant 0 : i32
    return %arg1, %c0_i32 : i32, i32
  }
  func.func @transform_3(%arg0: i32, %arg1: i32) -> (i32, i32) {
    %c0_i32 = arith.constant 0 : i32
    %c0_i32_0 = arith.constant 0 : i32
    return %arg0, %c0_i32 : i32, i32
  }
  func.func @transform_4(%arg0: i32, %arg1: i32) -> (i32, i32) {
    %c0_i32 = arith.constant 0 : i32
    %c0_i32_0 = arith.constant 0 : i32
    return %c0_i32, %arg1 : i32, i32
  }
  func.func @transform_5(%arg0: i32, %arg1: i32) -> (i32, i32) {
    %c0_i32 = arith.constant 0 : i32
    %c0_i32_0 = arith.constant 0 : i32
    return %arg0, %c0_i32 : i32, i32
  }
  func.func @transform_6(%arg0: i32, %arg1: i32) -> (i32, i32) {
    %c0_i32 = arith.constant 0 : i32
    %c0_i32_0 = arith.constant 0 : i32
    return %c0_i32, %arg1 : i32, i32
  }
  func.func @transform_7(%arg0: i32, %arg1: i32) -> (i32, i32, i32) {
    %c0_i32 = arith.constant 0 : i32
    %c0_i32_0 = arith.constant 0 : i32
    %c0_i32_1 = arith.constant 0 : i32
    return %arg0, %c0_i32, %c0_i32_0 : i32, i32, i32
  }
}

</mosaic_0001>

<llo_original>
// kernel: tpu_custom_call.1
$region0: #{tpu_custom_call.1}
  #allocation0 [shape = 'u32[]', space=smem, size = 0x4, offset = 0x4, fixed_abs, tag = 'smem constant byte address 0x4 - core index']
  #allocation1 [shape = 'u32[72,128]{1,0:T(1,128)}', space=vmem, size = 0x9000, scoped, tag = 'internal scratch']
  #allocation2 [shape = 'f32[1,1]{1,0:T(1,128)}', space=vmem, size = 0x200, scoped, tag = 'scratch operand']
  #allocation3 [shape = 'f32[1,1]{1,0:T(1,128)S(6)}', space=smem, size = 0x200, scoped, tag = 'scoped memory for tpu_custom_call.1']
  %s0 = inlined_call_operand.<no memory space> [shape: f32[1,1], index: 0, kind: input, shape index: {}]
  %s1 = inlined_call_operand.vmem [shape: f32[16,32], index: 1, kind: input, shape index: {}]
  %s2 = inlined_call_operand.vmem [shape: f32[16,32], index: 2, kind: input, shape index: {}]
  %s3 = inlined_call_operand.vmem [shape: f32[16,1], index: 3, kind: input, shape index: {}]
  %s4 = inlined_call_operand.vmem [shape: f32[1,16], index: 4, kind: input, shape index: {}]
  %s5 = inlined_call_operand.vmem [shape: f32[16,1], index: 5, kind: input, shape index: {}]
  %s6 = inlined_call_operand.vmem [shape: f32[1,16], index: 6, kind: input, shape index: {}]
  %s7 = inlined_call_operand.hbm [shape: f32[1,8,128], index: 7, kind: output, shape index: {}]
  %s8 = sld [smem:[#allocation0]]
  $region50: #{tpu_custom_call.1} parent=0
    _
  %s10 = ssub.s32 1, %s8
  %s11 = scalar_select 0, %s10, %s8
  %12 = sst [smem:[#allocation3]] %s0
  $region1: #{tpu_custom_call.1} parent=0
    #allocation4 [shape = 'u8[4096]{0}', space=vmem, size = 0x1000, scoped, tag = 'output window, operand 0, single buffered']
    #allocation5 [shape = 's32[1]{0}', space=sflag, size = 0x4, scoped, tag = 'scoped memory for tpu_custom_call.1']
    %13 = vsyncpa [#allocation5], 0
    // Predicated region
    $region2: #{tpu_custom_call.1} parent=1 // pred_check
      _
    $region3: #{tpu_custom_call.1} parent=1 // pred_check_branch
      %15 = sbr.rel (0) target = $region5
    $region4: #{tpu_custom_call.1} parent=1 // pred_region
      _
    $region5: #{tpu_custom_call.1} parent=1 // pred_fallthru
      _
    // Predicated region
    $region6: #{tpu_custom_call.1} parent=1 // pred_check
      _
    $region7: #{tpu_custom_call.1} parent=1 // pred_check_branch
      %17 = sbr.rel (0) target = $region9
    $region8: #{tpu_custom_call.1} parent=1 // pred_region
      _
    $region9: #{tpu_custom_call.1} parent=1 // pred_fallthru
      _
    // Predicated region
    $region10: #{tpu_custom_call.1} parent=1 // pred_check
      _
    $region11: #{tpu_custom_call.1} parent=1 // pred_check_branch
      %19 = sbr.rel (0) target = $region13
    $region12: #{tpu_custom_call.1} parent=1 // pred_region
      _
    $region13: #{tpu_custom_call.1} parent=1 // pred_fallthru
      _
    // Predicated region
    $region14: #{tpu_custom_call.1} parent=1 // pred_check
      _
    $region15: #{tpu_custom_call.1} parent=1 // pred_check_branch
      %21 = sbr.rel (0) target = $region17
    $region16: #{tpu_custom_call.1} parent=1 // pred_region
      _
    $region17: #{tpu_custom_call.1} parent=1 // pred_fallthru
      _
    // Predicated region
    $region18: #{tpu_custom_call.1} parent=1 // pred_check
      _
    $region19: #{tpu_custom_call.1} parent=1 // pred_check_branch
      %23 = sbr.rel (0) target = $region21
    $region20: #{tpu_custom_call.1} parent=1 // pred_region
      _
    $region21: #{tpu_custom_call.1} parent=1 // pred_fallthru
      _
    // Predicated region
    $region22: #{tpu_custom_call.1} parent=1 // pred_check
      _
    $region23: #{tpu_custom_call.1} parent=1 // pred_check_branch
      %25 = sbr.rel (0) target = $region25
    $region24: #{tpu_custom_call.1} parent=1 // pred_region
      _
    $region25: #{tpu_custom_call.1} parent=1 // pred_fallthru
      _
    // Predicated region
    $region26: #{tpu_custom_call.1} parent=1 // pred_check
      _
    $region27: #{tpu_custom_call.1} parent=1 // pred_check_branch
      %27 = sbr.rel (0) target = $region29
    $region28: #{tpu_custom_call.1} parent=1 // pred_region
      _
    $region29: #{tpu_custom_call.1} parent=1 // pred_fallthru
      _
    %p28 = scmp.eq.s32.totalorder 0, 0
    // Predicated region
    $region30: #{tpu_custom_call.1} parent=1 // pred_check
      %p29 = pneg %p28
    $region31: #{tpu_custom_call.1} parent=1 // pred_check_branch
      %31 = sbr.rel (%p29) target = $region33
    $region32: #{tpu_custom_call.1} parent=1 // pred_region
      %vm32 = vcmask 0
      %33 = vst.msk [vmem:[#allocation2] sm:$0x1] %vm32, 0.0
    $region33: #{tpu_custom_call.1} parent=1 // pred_fallthru
      _
    %p34 = scmp.ge.s32.totalorder 0, 0
    // Predicated region
    $region34: #{tpu_custom_call.1} parent=1 // pred_check
      %p35 = pneg %p34
    $region35: #{tpu_custom_call.1} parent=1 // pred_check_branch
      %37 = sbr.rel (%p35) target = $region37
    $region36: #{tpu_custom_call.1} parent=1 // pred_region
      %v38 = vld [vmem:[%s1] sm:$0xff]
      %v39 = vld [vmem:[%s1 + $0x8] sm:$0xff]
      %v40 = vld [vmem:[%s2] sm:$0xff]
      %v41 = vld [vmem:[%s2 + $0x8] sm:$0xff]
      %vm42 = vcmask 261120
      %v44 = vsel %vm42, %v38, 0
      %v47 = vsel %vm42, %v39, 0
      %v50 = vsel %vm42, %v40, 0
      %v53 = vsel %vm42, %v41, 0
      %55 = vmatpush.xpose.msra.mxu0 0.0
      %56 = vmatpush.xpose.msra.mxu0 0.0
      %57 = vmatpush.xpose.msra.mxu0 0.0
      %58 = vmatpush.xpose.msra.mxu0 0.0
      %59 = vmatpush.xpose.msra.mxu0 0.0
      %60 = vmatpush.xpose.msra.mxu0 0.0
      %61 = vmatpush.xpose.msra.mxu0 0.0
      %62 = vmatpush.xpose.msra.mxu0 0.0
      %63 = vmatpush.xpose.msra.mxu0 0.0
      %64 = vmatpush.xpose.msra.mxu0 0.0
      %65 = vmatpush.xpose.msra.mxu0 0.0
      %66 = vmatpush.xpose.msra.mxu0 0.0
      %67 = vmatpush.xpose.msra.mxu0 0.0
      %68 = vmatpush.xpose.msra.mxu0 0.0
      %69 = vmatpush.xpose.msra.mxu0 %v53
      %70 = vmatpush.xpose.msra.mxu0 %v50
      %71 = vmatmul.f32.gmra.mxu0 %v44
      %v72 = vpop.f32.mrf.mxu0
      %v73 = vadd.f32 0.0, %v72
      %74 = vmatmul.f32.gmra.mxu0 %v47
      %v75 = vpop.f32.mrf.mxu0
      %v76 = vadd.f32 0.0, %v75
      %77 = vdwg.mxu0
      %v78 = vld [vmem:[%s3] sm:$0xff]
      %v79 = vld [vmem:[%s3 + $0x8] sm:$0xff]
      %v80 = vld [vmem:[%s4] sm:$0x1]
      %82 = vset.pattern.permute.xlu0 0
      %83 = vperm.xlu0 %82, %v78
      %v84 = vpop.permute.xlu0 %83
      %87 = vset.pattern.permute.xlu0 0
      %88 = vperm.xlu0 %87, %v79
      %v89 = vpop.permute.xlu0 %88
      %v92 = vperm.slane %v80, 0
      %v94 = vadd.f32 %v84, %v92
      %v95 = vadd.f32 %v89, %v92
      %v96 = vmul.f32 %v73, 2.0
      %v97 = vmul.f32 %v76, 2.0
      %v98 = vsub.f32 %v94, %v96
      %v99 = vsub.f32 %v95, %v97
      %v100 = vmax.f32 %v98, 0.0
      %v101 = vmax.f32 %v99, 0.0
      %s102 = sld [smem:[#allocation3]]
      %v103 = vstv %s102
      %v104 = vmul.f32 %v100, %v103
      %v105 = vmul.f32 %v101, %v103
      %v106 = vmul.f32 %v104, 1.442695
      %v107 = vpow.pop %v106
      %v108 = vmul.f32 %v105, 1.442695
      %v109 = vpow.pop %v108
      %v110 = vmul.f32 %v107, %v107
      %v111 = vmul.f32 %v109, %v109
      %v112 = vadd.f32 %v107, %v110
      %v113 = vadd.f32 %v109, %v111
      %v114 = vmul.f32 %v110, %v110
      %v115 = vmul.f32 %v111, %v111
      %v116 = vadd.f32 %v112, %v114
      %v117 = vadd.f32 %v113, %v115
      %v118 = vmul.f32 %v114, %v114
      %v119 = vmul.f32 %v115, %v115
      %v120 = vadd.f32 %v116, %v118
      %v121 = vadd.f32 %v117, %v119
      %v122 = vmul.f32 %v118, %v118
      %v123 = vmul.f32 %v119, %v119
      %v124 = vadd.f32 %v120, %v122
      %v125 = vadd.f32 %v121, %v123
      %v126 = vld [vmem:[%s6] sm:$0x1]
      %v128 = vperm.slane %v126, 0
      %v130 = vmul.f32 %v124, %v128
      %v131 = vmul.f32 %v125, %v128
      %vm132 = vcmask 130048
      %v133 = vsel %vm132, %v130, 0.0
      %134 = vadd.xlane.f32.xlu0 %v133
      %v135 = vpop.xlane.xlu0 %134
      %v136 = vsel %vm132, %v131, 0.0
      %137 = vadd.xlane.f32.xlu0 %v136
      %v138 = vpop.xlane.xlu0 %137
      %v139 = vld [vmem:[%s5] sm:$0xff]
      %v140 = vld [vmem:[%s5 + $0x8] sm:$0xff]
      %v141 = vmul.f32 %v135, %v139
      %v142 = vmul.f32 %v138, %v140
      %vm143 = vcmask 7168
      %v144 = vsel %vm143, %v141, 0.0
      %v145 = vsel %vm143, %v142, 0.0
      %v146 = vadd.f32 %v144, %v145
      %147 = vadd.xlane.f32.xlu0 %v146
      %v148 = vpop.xlane.xlu0 %147
      %v149 = vrot.slane %v148, 4
      %v150 = vadd.f32 %v148, %v149
      %v151 = vrot.slane %v150, 2
      %v152 = vadd.f32 %v150, %v151
      %v153 = vrot.slane %v152, 1
      %v154 = vadd.f32 %v152, %v153
      %s155 = vtos %v154
      %p156 = scmp.eq.s32.totalorder 0, 0
      %s157 = scalar_select %p156, 1.0, 2.0
      %v158 = vld [vmem:[#allocation2] sm:$0x1]
      %s159 = smul.f32 %s157, %s155
      %v160 = vstv %s159
      %v161 = vadd.f32 %v158, %v160
      %vm162 = vcmask 0
      %163 = vst.msk [vmem:[#allocation2] sm:$0x1] %vm162, %v161
    $region37: #{tpu_custom_call.1} parent=1 // pred_fallthru
      _
    // Predicated region
    $region38: #{tpu_custom_call.1} parent=1 // pred_check
      %p164 = pneg %p28
    $region39: #{tpu_custom_call.1} parent=1 // pred_check_branch
      %166 = sbr.rel (%p164) target = $region41
    $region40: #{tpu_custom_call.1} parent=1 // pred_region
      %v167 = vld [vmem:[#allocation2] sm:$0x1]
      %v169 = vperm.slane %v167, 0
      %170 = vset.pattern.permute.xlu0 0
      %171 = vperm.xlu0 %170, %v169
      %v172 = vpop.permute.xlu0 %171
      %174 = vst [vmem:[#allocation4] sm:$0xff] %v172
    $region41: #{tpu_custom_call.1} parent=1 // pred_fallthru
      _
    // Predicated region
    $region42: #{tpu_custom_call.1} parent=1 // pred_check
      _
    $region43: #{tpu_custom_call.1} parent=1 // pred_check_branch
      %176 = sbr.rel (0) target = $region45
    $region44: #{tpu_custom_call.1} parent=1 // pred_region
      %178 = vsyncadd [#allocation5], 0
      %s180 = sshll.u32 [#allocation4], 4
      %s181 = int_to_ptr.vmem [resolvable:$true] %s180
      %s182 = sshll.u32 %s7, 4
      %s183 = int_to_ptr.hbm [resolvable:$true] %s182
      %185 = dma.vmem_to_hbm [thread:$0]  %s181, 128, %s183, [#allocation5]
    $region45: #{tpu_custom_call.1} parent=1 // pred_fallthru
      _
    // Predicated region
    $region46: #{tpu_custom_call.1} parent=1 // pred_check
      _
    $region47: #{tpu_custom_call.1} parent=1 // pred_check_branch
      %187 = sbr.rel (0) target = $region49
    $region48: #{tpu_custom_call.1} parent=1 // pred_region
      %189 = dma.done [#allocation5], 128
    $region49: #{tpu_custom_call.1} parent=1 // pred_fallthru
      _
    %190 = vsyncpa [#allocation5], 1

</llo_original>
